<compile_context>
chip_gen: v5e
topology: v5e:2x2
jax: 0.10.0
libtpu: 0.0.40
codegen_flags: <defaults>
</compile_context>

<pallas_src>
import jax
import jax.numpy as jnp
from jax.experimental import pallas as pl
from jax.experimental.pallas import tpu as pltpu

# BT.601 constants used by CompressAI's rgb2ycbcr / ycbcr2rgb.
_KR, _KG, _KB = 0.299, 0.587, 0.114
_MAX = 255.0                          # 2**8 - 1
_HALF = 127.5                         # 0.5 in the 0..255 domain
_CB_SCALE = 0.5 / (1.0 - _KB)         # cb = (b - y) * _CB_SCALE + 127.5
_CR_SCALE = 0.5 / (1.0 - _KR)
_R_FROM_CR = 2.0 - 2.0 * _KR          # 1.402
_B_FROM_CB = 2.0 - 2.0 * _KB          # 1.772
_G_FROM_CR = _KR * _R_FROM_CR / _KG   # 0.714136...
_G_FROM_CB = _KB * _B_FROM_CB / _KG   # 0.344136...


def _round_trip_chunk(x_ref, o_ref, r0, rows):
    """rgb -> ycbcr -> quantize -> (codec identity) -> ycbcr -> rgb on (rows, TW).

    All math is done in the 0..255 domain; the chunk is sized so the whole f32
    intermediate chain stays in vregs (no VMEM round trips through the vst slot).
    """
    rs = pl.ds(r0, rows)
    r = x_ref[0, rs, :].astype(jnp.float32)
    g = x_ref[1, rs, :].astype(jnp.float32)
    b = x_ref[2, rs, :].astype(jnp.float32)

    # --- rgb2ycbcr (CompressAI, scaled by 255) ---
    y = _KR * r + _KG * g + _KB * b
    cb = (b - y) * _CB_SCALE + _HALF
    cr = (r - y) * _CR_SCALE + _HALF

    # Quantize to uint8 codes. y >= 0 by construction, so only the upper clamp.
    yq = jnp.floor(jnp.minimum(y, _MAX))
    dcb = jnp.floor(jnp.clip(cb, 0.0, _MAX)) - _HALF   # centered chroma code
    dcr = jnp.floor(jnp.clip(cr, 0.0, _MAX)) - _HALF
    # TODO(synk): external VTM encoder/decoder round trip (and file-size return)
    #             of the quantized YCbCr planes is not expressible on TPU;
    #             modeled as identity here.

    # --- ycbcr2rgb (CompressAI, scaled by 255) ---
    # clip(0,255) + floor + u8 cast  ==  original clip(0,1)*255 -> uint8.
    rr = yq + _R_FROM_CR * dcr
    o_ref[0, rs, :] = jnp.floor(jnp.clip(rr, 0.0, _MAX)).astype(jnp.uint8)
    bb = yq + _B_FROM_CB * dcb
    o_ref[2, rs, :] = jnp.floor(jnp.clip(bb, 0.0, _MAX)).astype(jnp.uint8)
    # g directly from the chroma codes:
    #   (y - KR*r - KB*b)/KG == y - (KR*1.402/KG)*dcr - (KB*1.772/KG)*dcb
    gg = yq - _G_FROM_CB * dcb - _G_FROM_CR * dcr
    o_ref[1, rs, :] = jnp.floor(jnp.clip(gg, 0.0, _MAX)).astype(jnp.uint8)


def _make_kernel(sub, n_sub):
    """Kernel over a (3, TH, TW) uint8 block, processed in SUB-row chunks."""

    def kernel(x_ref, o_ref):
        if n_sub <= 8:
            # Short chunk count: static unroll with static (aligned) offsets.
            for s in range(n_sub):
                _round_trip_chunk(x_ref, o_ref, s * sub, sub)
        else:
            # Long chunk count: in-kernel loop; sub == 32 here, so every load /
            # store is aligned with the uint8 (32, 128) sublane tile.
            @pl.loop(0, n_sub)
            def _(s):
                _round_trip_chunk(x_ref, o_ref, pl.multiple_of(s * sub, sub), sub)

    return kernel


def _tile_params(H, Wp):
    """(TW, TH, SUB, N_SUB) for a (3, H, Wp) uint8 plane stack (Wp % 128 == 0)."""
    # Lane tile: a multiple of 128 dividing Wp, capped at 256 so a 32-row f32
    # chunk (~5 live intermediates) fits comfortably in the 64 vregs.
    tw = 256 if Wp % 256 == 0 else 128
    # Row tile: multiple of 32, ~256K px/channel per block (uint8-only blocks,
    # < 1 MB each -> trivially fits v7x's 64 MiB VMEM), and at least 2 row
    # blocks when H >= 64 so both v7x TensorCores get work.
    th = max(32, (256 * 1024 // tw) // 32 * 32)
    if H >= 64:
        th = min(th, (((H + 1) // 2) + 31) // 32 * 32)
    else:
        th = H                                   # small image: one row block
    # In-kernel row-chunk size: largest of 32/16/8 dividing TH (32 = u8 tile).
    sub = next((c for c in (32, 16, 8) if th % c == 0), th)
    return tw, th, sub, th // sub


def _vtm_round_trip_chw(x_chw_u8):
    """Core Pallas call on planar CHW uint8: (3, H, W) -> (3, H, W) uint8."""
    C, H, W = x_chw_u8.shape
    assert C == 3
    # Pad W up to a multiple of 128: lane-dense blocks, unmasked vector stores.
    Wp = (W + 127) // 128 * 128
    x = x_chw_u8 if Wp == W else jnp.pad(x_chw_u8, ((0, 0), (0, 0), (0, Wp - W)))
    tw, th, sub, n_sub = _tile_params(H, Wp)
    grid = (pl.cdiv(H, th), Wp // tw)

    out = pl.pallas_call(
        _make_kernel(sub, n_sub),
        out_shape=jax.ShapeDtypeStruct((3, H, Wp), jnp.uint8),
        grid_spec=pltpu.PrefetchScalarGridSpec(
            num_scalar_prefetch=0,
            grid=grid,
            in_specs=[pl.BlockSpec((3, th, tw), lambda i, j: (0, i, j))],
            out_specs=pl.BlockSpec((3, th, tw), lambda i, j: (0, i, j)),
        ),
        compiler_params=pltpu.CompilerParams(
            dimension_semantics=("parallel", "parallel"),
            vmem_limit_bytes=32 * 1024 * 1024,
        ),
    )(x)
    return out if Wp == W else out[:, :, :W]


@jax.jit
def vtm_module_forward_chw(img_chw_u8):
    """Preferred entry: planar CHW uint8 in/out (no HWC<->CHW transposes)."""
    return _vtm_round_trip_chw(img_chw_u8)


@jax.jit
def vtm_module_forward(img_hwc_u8):
    """VTMModule.forward equivalent: (H, W, 3) uint8 RGB -> (H, W, 3) uint8 RGB.

    The two layout transposes stay uint8 (4x cheaper than f32); if the
    surrounding pipeline can stay planar, use vtm_module_forward_chw instead.
    """
    x_chw = jnp.transpose(img_hwc_u8, (2, 0, 1))
    out_chw = _vtm_round_trip_chw(x_chw)
    return jnp.transpose(out_chw, (1, 2, 0))


# ------------------------------- self-check ---------------------------------

def _reference(img_hwc_u8):
    """Pure-JAX reference in the original (0..1 domain) formulation."""
    arr = jnp.transpose(img_hwc_u8, (2, 0, 1)).astype(jnp.float32) / _MAX
    r, g, b = arr[0], arr[1], arr[2]
    y = _KR * r + _KG * g + _KB * b
    cb = 0.5 * (b - y) / (1.0 - _KB) + 0.5
    cr = 0.5 * (r - y) / (1.0 - _KR) + 0.5
    q = jnp.floor(jnp.clip(jnp.stack([y, cb, cr]), 0.0, 1.0) * _MAX)
    rec = q / _MAX
    yy, cbb, crr = rec[0], rec[1], rec[2]
    rr = yy + (2.0 - 2.0 * _KR) * (crr - 0.5)
    bb = yy + (2.0 - 2.0 * _KB) * (cbb - 0.5)
    gg = (yy - _KR * rr - _KB * bb) / _KG
    out = jnp.floor(jnp.clip(jnp.stack([rr, gg, bb]), 0.0, 1.0) * _MAX)
    return jnp.transpose(out, (1, 2, 0)).astype(jnp.uint8)


def _check(out, ref, shape):
    assert out.shape == shape and out.dtype == jnp.uint8
    diff = int(jnp.max(jnp.abs(out.astype(jnp.int32) - ref.astype(jnp.int32))))
    # +/-1 code flips at floor boundaries (different f32 evaluation order) can
    # propagate through the 1.402 / 1.772 chroma gains -> allow up to 2.
    assert diff <= 2, f"max abs diff {diff} > 2"


if __name__ == "__main__":
    key = jax.random.PRNGKey(0)
    cases = [
        (16, 16),    # single block, W padded 16 -> 128, single static chunk
        (96, 48),    # 2 row blocks (partial last block), W padded 48 -> 128
        (64, 640),   # 2-D grid: 2 row blocks x 5 column blocks (tw = 128)
        (544, 128),  # th = 288 -> 9 x 32-row chunks: dynamic pl.loop path
    ]
    for (h, w) in cases:
        key, k = jax.random.split(key)
        img = jax.random.randint(k, (h, w, 3), 0, 256, dtype=jnp.int32).astype(jnp.uint8)
        out = jax.block_until_ready(vtm_module_forward(img))
        ref = jax.block_until_ready(_reference(img))
        _check(out, ref, (h, w, 3))
    print("KERNEL_OK")
</pallas_src>

<mosaic_0001>
module attributes {stable_mosaic.version = 11 : i64} {
  func.func @kernel(%arg0: i32, %arg1: i32, %arg2: memref<3x16x128xi8, #tpu.memory_space<vmem>>, %arg3: memref<3x16x128xi8, #tpu.memory_space<vmem>>) attributes {dimension_semantics = [#tpu.dimension_semantics<parallel>, #tpu.dimension_semantics<parallel>], iteration_bounds = array<i64: 1, 1>, scalar_prefetch = 0 : i64, scratch_operands = 0 : i64, tpu.core_type = #tpu.core_type<tc>, window_params = [{transform_indices = @transform_0, window_bounds = array<i64: 3, 16, 128>}, {transform_indices = @transform_1, window_bounds = array<i64: 3, 16, 128>}]} {
    %c0 = arith.constant 0 : index
    %c0_0 = arith.constant 0 : index
    %c0_1 = arith.constant 0 : index
    %0 = vector.load %arg2[%c0, %c0_0, %c0_1] : memref<3x16x128xi8, #tpu.memory_space<vmem>>, vector<1x16x128xi8>
    %1 = vector.shape_cast %0 : vector<1x16x128xi8> to vector<16x128xi8>
    %2 = arith.uitofp %1 : vector<16x128xi8> to vector<16x128xf32>
    %c1 = arith.constant 1 : index
    %c0_2 = arith.constant 0 : index
    %c0_3 = arith.constant 0 : index
    %3 = vector.load %arg2[%c1, %c0_2, %c0_3] : memref<3x16x128xi8, #tpu.memory_space<vmem>>, vector<1x16x128xi8>
    %4 = vector.shape_cast %3 : vector<1x16x128xi8> to vector<16x128xi8>
    %5 = arith.uitofp %4 : vector<16x128xi8> to vector<16x128xf32>
    %c2 = arith.constant 2 : index
    %c0_4 = arith.constant 0 : index
    %c0_5 = arith.constant 0 : index
    %6 = vector.load %arg2[%c2, %c0_4, %c0_5] : memref<3x16x128xi8, #tpu.memory_space<vmem>>, vector<1x16x128xi8>
    %7 = vector.shape_cast %6 : vector<1x16x128xi8> to vector<16x128xi8>
    %8 = arith.uitofp %7 : vector<16x128xi8> to vector<16x128xf32>
    %cst = arith.constant 2.990000e-01 : f32
    %9 = vector.broadcast %cst : f32 to vector<16x128xf32>
    %10 = arith.mulf %9, %2 : vector<16x128xf32>
    %cst_6 = arith.constant 5.870000e-01 : f32
    %11 = vector.broadcast %cst_6 : f32 to vector<16x128xf32>
    %12 = arith.mulf %11, %5 : vector<16x128xf32>
    %13 = arith.addf %10, %12 : vector<16x128xf32>
    %cst_7 = arith.constant 1.140000e-01 : f32
    %14 = vector.broadcast %cst_7 : f32 to vector<16x128xf32>
    %15 = arith.mulf %14, %8 : vector<16x128xf32>
    %16 = arith.addf %13, %15 : vector<16x128xf32>
    %17 = arith.subf %8, %16 : vector<16x128xf32>
    %cst_8 = arith.constant 0.564334095 : f32
    %18 = vector.broadcast %cst_8 : f32 to vector<16x128xf32>
    %19 = arith.mulf %17, %18 : vector<16x128xf32>
    %cst_9 = arith.constant 1.275000e+02 : f32
    %20 = vector.broadcast %cst_9 : f32 to vector<16x128xf32>
    %21 = arith.addf %19, %20 : vector<16x128xf32>
    %22 = arith.subf %2, %16 : vector<16x128xf32>
    %cst_10 = arith.constant 0.713266789 : f32
    %23 = vector.broadcast %cst_10 : f32 to vector<16x128xf32>
    %24 = arith.mulf %22, %23 : vector<16x128xf32>
    %cst_11 = arith.constant 1.275000e+02 : f32
    %25 = vector.broadcast %cst_11 : f32 to vector<16x128xf32>
    %26 = arith.addf %24, %25 : vector<16x128xf32>
    %cst_12 = arith.constant 2.550000e+02 : f32
    %27 = vector.broadcast %cst_12 : f32 to vector<16x128xf32>
    %28 = arith.minimumf %16, %27 : vector<16x128xf32>
    %29 = math.floor %28 : vector<16x128xf32>
    %cst_13 = arith.constant 0.000000e+00 : f32
    %cst_14 = arith.constant 2.550000e+02 : f32
    %30 = vector.broadcast %cst_13 : f32 to vector<16x128xf32>
    %31 = arith.maximumf %30, %21 : vector<16x128xf32>
    %32 = vector.broadcast %cst_14 : f32 to vector<16x128xf32>
    %33 = arith.minimumf %32, %31 : vector<16x128xf32>
    %34 = math.floor %33 : vector<16x128xf32>
    %cst_15 = arith.constant 1.275000e+02 : f32
    %35 = vector.broadcast %cst_15 : f32 to vector<16x128xf32>
    %36 = arith.subf %34, %35 : vector<16x128xf32>
    %cst_16 = arith.constant 0.000000e+00 : f32
    %cst_17 = arith.constant 2.550000e+02 : f32
    %37 = vector.broadcast %cst_16 : f32 to vector<16x128xf32>
    %38 = arith.maximumf %37, %26 : vector<16x128xf32>
    %39 = vector.broadcast %cst_17 : f32 to vector<16x128xf32>
    %40 = arith.minimumf %39, %38 : vector<16x128xf32>
    %41 = math.floor %40 : vector<16x128xf32>
    %cst_18 = arith.constant 1.275000e+02 : f32
    %42 = vector.broadcast %cst_18 : f32 to vector<16x128xf32>
    %43 = arith.subf %41, %42 : vector<16x128xf32>
    %cst_19 = arith.constant 1.402000e+00 : f32
    %44 = vector.broadcast %cst_19 : f32 to vector<16x128xf32>
    %45 = arith.mulf %44, %43 : vector<16x128xf32>
    %46 = arith.addf %29, %45 : vector<16x128xf32>
    %cst_20 = arith.constant 0.000000e+00 : f32
    %cst_21 = arith.constant 2.550000e+02 : f32
    %47 = vector.broadcast %cst_20 : f32 to vector<16x128xf32>
    %48 = arith.maximumf %47, %46 : vector<16x128xf32>
    %49 = vector.broadcast %cst_21 : f32 to vector<16x128xf32>
    %50 = arith.minimumf %49, %48 : vector<16x128xf32>
    %51 = math.floor %50 : vector<16x128xf32>
    %52 = arith.fptoui %51 : vector<16x128xf32> to vector<16x128xi8>
    %c0_22 = arith.constant 0 : index
    %c0_23 = arith.constant 0 : index
    %c0_24 = arith.constant 0 : index
    %53 = vector.load %arg3[%c0_22, %c0_23, %c0_24] : memref<3x16x128xi8, #tpu.memory_space<vmem>>, vector<1x16x128xi8>
    %54 = vector.shape_cast %53 : vector<1x16x128xi8> to vector<16x128xi8>
    %55 = vector.shape_cast %52 : vector<16x128xi8> to vector<1x16x128xi8>
    tpu.vector_store %arg3[%c0_22, %c0_23, %c0_24], %55 {strides = array<i32>} : memref<3x16x128xi8, #tpu.memory_space<vmem>>, vector<1x16x128xi8>,
    %cst_25 = arith.constant 1.772000e+00 : f32
    %56 = vector.broadcast %cst_25 : f32 to vector<16x128xf32>
    %57 = arith.mulf %56, %36 : vector<16x128xf32>
    %58 = arith.addf %29, %57 : vector<16x128xf32>
    %cst_26 = arith.constant 0.000000e+00 : f32
    %cst_27 = arith.constant 2.550000e+02 : f32
    %59 = vector.broadcast %cst_26 : f32 to vector<16x128xf32>
    %60 = arith.maximumf %59, %58 : vector<16x128xf32>
    %61 = vector.broadcast %cst_27 : f32 to vector<16x128xf32>
    %62 = arith.minimumf %61, %60 : vector<16x128xf32>
    %63 = math.floor %62 : vector<16x128xf32>
    %64 = arith.fptoui %63 : vector<16x128xf32> to vector<16x128xi8>
    %c2_28 = arith.constant 2 : index
    %c0_29 = arith.constant 0 : index
    %c0_30 = arith.constant 0 : index
    %65 = vector.load %arg3[%c2_28, %c0_29, %c0_30] : memref<3x16x128xi8, #tpu.memory_space<vmem>>, vector<1x16x128xi8>
    %66 = vector.shape_cast %65 : vector<1x16x128xi8> to vector<16x128xi8>
    %67 = vector.shape_cast %64 : vector<16x128xi8> to vector<1x16x128xi8>
    tpu.vector_store %arg3[%c2_28, %c0_29, %c0_30], %67 {strides = array<i32>} : memref<3x16x128xi8, #tpu.memory_space<vmem>>, vector<1x16x128xi8>,
    %cst_31 = arith.constant 0.344136298 : f32
    %68 = vector.broadcast %cst_31 : f32 to vector<16x128xf32>
    %69 = arith.mulf %68, %36 : vector<16x128xf32>
    %70 = arith.subf %29, %69 : vector<16x128xf32>
    %cst_32 = arith.constant 0.714136302 : f32
    %71 = vector.broadcast %cst_32 : f32 to vector<16x128xf32>
    %72 = arith.mulf %71, %43 : vector<16x128xf32>
    %73 = arith.subf %70, %72 : vector<16x128xf32>
    %cst_33 = arith.constant 0.000000e+00 : f32
    %cst_34 = arith.constant 2.550000e+02 : f32
    %74 = vector.broadcast %cst_33 : f32 to vector<16x128xf32>
    %75 = arith.maximumf %74, %73 : vector<16x128xf32>
    %76 = vector.broadcast %cst_34 : f32 to vector<16x128xf32>
    %77 = arith.minimumf %76, %75 : vector<16x128xf32>
    %78 = math.floor %77 : vector<16x128xf32>
    %79 = arith.fptoui %78 : vector<16x128xf32> to vector<16x128xi8>
    %c1_35 = arith.constant 1 : index
    %c0_36 = arith.constant 0 : index
    %c0_37 = arith.constant 0 : index
    %80 = vector.load %arg3[%c1_35, %c0_36, %c0_37] : memref<3x16x128xi8, #tpu.memory_space<vmem>>, vector<1x16x128xi8>
    %81 = vector.shape_cast %80 : vector<1x16x128xi8> to vector<16x128xi8>
    %82 = vector.shape_cast %79 : vector<16x128xi8> to vector<1x16x128xi8>
    tpu.vector_store %arg3[%c1_35, %c0_36, %c0_37], %82 {strides = array<i32>} : memref<3x16x128xi8, #tpu.memory_space<vmem>>, vector<1x16x128xi8>,
    return
  }
  func.func @transform_0(%arg0: i32, %arg1: i32) -> (i32, i32, i32) {
    %c0_i32 = arith.constant 0 : i32
    %c0_i32_0 = arith.constant 0 : i32
    return %c0_i32, %arg0, %arg1 : i32, i32, i32
  }
  func.func @transform_1(%arg0: i32, %arg1: i32) -> (i32, i32, i32) {
    %c0_i32 = arith.constant 0 : i32
    %c0_i32_0 = arith.constant 0 : i32
    return %c0_i32, %arg0, %arg1 : i32, i32, i32
  }
}

</mosaic_0001>

<llo_original>
// kernel: vtm_module_forward.1
$region0: #{vtm_module_forward.1}
  #allocation0 [shape = 'u32[]', space=smem, size = 0x4, offset = 0x4, fixed_abs, tag = 'smem constant byte address 0x4 - core index']
  #allocation1 [shape = 'u32[72,128]{1,0:T(1,128)}', space=vmem, size = 0x9000, scoped, tag = 'internal scratch']
  %s0 = inlined_call_operand.vmem [shape: u8[3,16,128], index: 0, kind: input, shape index: {}]
  %s1 = inlined_call_operand.vmem [shape: u8[3,16,128], index: 1, kind: output, shape index: {}]
  %s2 = sld [smem:[#allocation0]]
  $region14: #{vtm_module_forward.1} parent=0
    _
  %s4 = ssub.s32 1, %s2
  %s5 = scalar_select 0, %s4, %s2
  // Predicated region
  $region2: #{vtm_module_forward.1} parent=0 // pred_check
    _
  $region3: #{vtm_module_forward.1} parent=0 // pred_check_branch
    %7 = sbr.rel (0) target = $region5
  $region4: #{vtm_module_forward.1} parent=0 // pred_region
    _
  $region5: #{vtm_module_forward.1} parent=0 // pred_fallthru
    _
  %v8 = vld [vmem:[%s0] sm:$0x3]
  %v9 = vld [vmem:[%s0 + $0x2] sm:$0x3]
  %v10 = vunpack.c.0.s8 %v8
  %v11 = vunpack.c.0.s8 %v9
  %v12 = vand.u32 %v10, 255
  %v13 = vand.u32 %v11, 255
  %v14 = vcvt.s32.f32 %v12
  %v15 = vcvt.s32.f32 %v13
  %s16 = scalar_lea.vmem %s0, 4
  %v17 = vld [vmem:[%s16] sm:$0x3]
  %v18 = vld [vmem:[%s16 + $0x2] sm:$0x3]
  %v19 = vunpack.c.0.s8 %v17
  %v20 = vunpack.c.0.s8 %v18
  %v21 = vand.u32 %v19, 255
  %v22 = vand.u32 %v20, 255
  %v23 = vcvt.s32.f32 %v21
  %v24 = vcvt.s32.f32 %v22
  %s25 = scalar_lea.vmem %s0, 8
  %v26 = vld [vmem:[%s25] sm:$0x3]
  %v27 = vld [vmem:[%s25 + $0x2] sm:$0x3]
  %v28 = vunpack.c.0.s8 %v26
  %v29 = vunpack.c.0.s8 %v27
  %v30 = vand.u32 %v28, 255
  %v31 = vand.u32 %v29, 255
  %v32 = vcvt.s32.f32 %v30
  %v33 = vcvt.s32.f32 %v31
  %v34 = vmul.f32 %v14, 0.299
  %v35 = vmul.f32 %v15, 0.299
  %v36 = vmul.f32 %v23, 0.587
  %v37 = vmul.f32 %v24, 0.587
  %v38 = vadd.f32 %v34, %v36
  %v39 = vadd.f32 %v35, %v37
  %v40 = vmul.f32 %v32, 0.114
  %v41 = vmul.f32 %v33, 0.114
  %v42 = vadd.f32 %v38, %v40
  %v43 = vadd.f32 %v39, %v41
  %v44 = vsub.f32 %v32, %v42
  %v45 = vsub.f32 %v33, %v43
  %v46 = vmul.f32 %v44, 0.5643341
  %v47 = vmul.f32 %v45, 0.5643341
  %v48 = vadd.f32 %v46, 127.5
  %v49 = vadd.f32 %v47, 127.5
  %v50 = vsub.f32 %v14, %v42
  %v51 = vsub.f32 %v15, %v43
  %v52 = vmul.f32 %v50, 0.7132668
  %v53 = vmul.f32 %v51, 0.7132668
  %v54 = vadd.f32 %v52, 127.5
  %v55 = vadd.f32 %v53, 127.5
  %v56 = vmin.f32 %v42, 255.0
  %v57 = vmin.f32 %v43, 255.0
  %v58 = vfloor.f32 %v56
  %v59 = vfloor.f32 %v57
  %v60 = vmax.f32 %v48, 0.0
  %v61 = vmax.f32 %v49, 0.0
  %v62 = vmin.f32 %v60, 255.0
  %v63 = vmin.f32 %v61, 255.0
  %v64 = vfloor.f32 %v62
  %v65 = vfloor.f32 %v63
  %v66 = vsub.f32 %v64, 127.5
  %v67 = vsub.f32 %v65, 127.5
  %v68 = vmax.f32 %v54, 0.0
  %v69 = vmax.f32 %v55, 0.0
  %v70 = vmin.f32 %v68, 255.0
  %v71 = vmin.f32 %v69, 255.0
  %v72 = vfloor.f32 %v70
  %v73 = vfloor.f32 %v71
  %v74 = vsub.f32 %v72, 127.5
  %v75 = vsub.f32 %v73, 127.5
  %v76 = vmul.f32 %v74, 1.402
  %v77 = vmul.f32 %v75, 1.402
  %v78 = vadd.f32 %v58, %v76
  %v79 = vadd.f32 %v59, %v77
  %v80 = vmax.f32 %v78, 0.0
  %v81 = vmax.f32 %v79, 0.0
  %v82 = vmin.f32 %v80, 255.0
  %v83 = vmin.f32 %v81, 255.0
  %v84 = vfloor.f32 %v82
  %v85 = vfloor.f32 %v83
  %v86 = vmax.f32 %v84, 0.0
  %v87 = vmax.f32 %v85, 0.0
  %v88 = vmin.f32 %v86, 255.0
  %v89 = vmin.f32 %v87, 255.0
  %v90 = vcvt.f32.s32.to.zero.pseudo %v88
  %v91 = vcvt.f32.s32.to.zero.pseudo %v89
  %v92 = vpack.c.b16 %v90, %v90
  %v93 = vpack.c.b8 %v92, %v92
  %v94 = vpack.c.b16 %v91, %v91
  %v95 = vpack.c.b8 %v94, %v94
  %96 = vst [vmem:[%s1] sm:$0x3] %v93
  %97 = vst [vmem:[%s1 + $0x2] sm:$0x3] %v95
  %v98 = vmul.f32 %v66, 1.772
  %v99 = vmul.f32 %v67, 1.772
  %v100 = vadd.f32 %v58, %v98
  %v101 = vadd.f32 %v59, %v99
  %v102 = vmax.f32 %v100, 0.0
  %v103 = vmax.f32 %v101, 0.0
  %v104 = vmin.f32 %v102, 255.0
  %v105 = vmin.f32 %v103, 255.0
  %v106 = vfloor.f32 %v104
  %v107 = vfloor.f32 %v105
  %v108 = vmax.f32 %v106, 0.0
  %v109 = vmax.f32 %v107, 0.0
  %v110 = vmin.f32 %v108, 255.0
  %v111 = vmin.f32 %v109, 255.0
  %v112 = vcvt.f32.s32.to.zero.pseudo %v110
  %v113 = vcvt.f32.s32.to.zero.pseudo %v111
  %v114 = vpack.c.b16 %v112, %v112
  %v115 = vpack.c.b8 %v114, %v114
  %v116 = vpack.c.b16 %v113, %v113
  %v117 = vpack.c.b8 %v116, %v116
  %s118 = scalar_lea.vmem %s1, 8
  %119 = vst [vmem:[%s118] sm:$0x3] %v115
  %120 = vst [vmem:[%s118 + $0x2] sm:$0x3] %v117
  %v121 = vmul.f32 %v66, 0.3441363
  %v122 = vmul.f32 %v67, 0.3441363
  %v123 = vsub.f32 %v58, %v121
  %v124 = vsub.f32 %v59, %v122
  %v125 = vmul.f32 %v74, 0.7141363
  %v126 = vmul.f32 %v75, 0.7141363
  %v127 = vsub.f32 %v123, %v125
  %v128 = vsub.f32 %v124, %v126
  %v129 = vmax.f32 %v127, 0.0
  %v130 = vmax.f32 %v128, 0.0
  %v131 = vmin.f32 %v129, 255.0
  %v132 = vmin.f32 %v130, 255.0
  %v133 = vfloor.f32 %v131
  %v134 = vfloor.f32 %v132
  %v135 = vmax.f32 %v133, 0.0
  %v136 = vmax.f32 %v134, 0.0
  %v137 = vmin.f32 %v135, 255.0
  %v138 = vmin.f32 %v136, 255.0
  %v139 = vcvt.f32.s32.to.zero.pseudo %v137
  %v140 = vcvt.f32.s32.to.zero.pseudo %v138
  %v141 = vpack.c.b16 %v139, %v139
  %v142 = vpack.c.b8 %v141, %v141
  %v143 = vpack.c.b16 %v140, %v140
  %v144 = vpack.c.b8 %v143, %v143
  %s145 = scalar_lea.vmem %s1, 4
  %146 = vst [vmem:[%s145] sm:$0x3] %v142
  %147 = vst [vmem:[%s145 + $0x2] sm:$0x3] %v144
  // Predicated region
  $region6: #{vtm_module_forward.1} parent=0 // pred_check
    _
  $region7: #{vtm_module_forward.1} parent=0 // pred_check_branch
    %149 = sbr.rel (0) target = $region9
  $region8: #{vtm_module_forward.1} parent=0 // pred_region
    _
  $region9: #{vtm_module_forward.1} parent=0 // pred_fallthru
    _
  // Predicated region
  $region10: #{vtm_module_forward.1} parent=0 // pred_check
    _
  $region11: #{vtm_module_forward.1} parent=0 // pred_check_branch
    %151 = sbr.rel (0) target = $region13
  $region12: #{vtm_module_forward.1} parent=0 // pred_region
    _
  $region13: #{vtm_module_forward.1} parent=0 // pred_fallthru
    _

</llo_original>
